<compile_context>
chip_gen: v7x
topology: tpu7x:2x2x1
jax: 0.10.0
libtpu: 0.0.40
codegen_flags: <defaults>
</compile_context>

<pallas_src>
import functools

import jax
import jax.numpy as jnp
from jax import lax
from jax.experimental import pallas as pl
from jax.experimental.pallas import tpu as pltpu


SEQ_CHUNK = 8       # sequence chunk for the one-hot / count construction
TB_MAX = 256        # max batch tile (MXU row dim; 256 matches v6e/v7x MXU)


def dense_network_kernel(ids_ref, emb_ref, w1_ref, b1_ref, w2_ref, b2_ref,
                         out_ref, *, seq_chunk):
    """One batch tile of the full forward pass.

    ids_ref : (TB, Sp) int32 token ids in VMEM; padding slots hold -1
    emb_ref : (Vp, Ep) bf16 zero-padded embedding table
    w1_ref  : (Ep, Hp) bf16 zero-padded fc1 weight
    b1_ref  : (1,  Hp) f32  zero-padded fc1 bias
    w2_ref  : (Hp, Cp) bf16 zero-padded fc2 weight
    b2_ref  : (1,  Cp) f32  fc2 bias; padded class lanes hold -1e30
    out_ref : (TB, Cp) f32  softmax probabilities (padded class lanes are 0)
    """
    ids = ids_ref[...]                                   # (TB, Sp) int32
    tb, sp = ids.shape
    vp = emb_ref.shape[0]

    # ---- token counts over the vocab (VPU, chunked over the sequence) ----
    # counts[b, v] = #{ s : ids[b, s] == v }.  Pad ids (-1) and any id >= Vp
    # match nothing; ids in [VOCAB, Vp) hit zero table rows -> contribute 0.
    iota_v = lax.broadcasted_iota(jnp.int32, (tb, seq_chunk, vp), 2)  # hoisted
    counts = jnp.zeros((tb, vp), jnp.float32)
    for s0 in range(0, sp, seq_chunk):                   # static, bounded unroll
        chunk = ids[:, s0:s0 + seq_chunk]                # (TB, seq_chunk)
        onehot = (chunk[:, :, None] == iota_v).astype(jnp.float32)
        counts = counts + jnp.sum(onehot, axis=1)        # (TB, Vp)

    # ---- sum of embeddings over the sequence == counts @ table (MXU) ----
    sum_emb = jnp.dot(counts.astype(emb_ref.dtype), emb_ref[...],
                      preferred_element_type=jnp.float32)        # (TB, Ep) f32

    # ---- fc1 + bias + ReLU (bf16 MXU operands, f32 accumulate) ----
    h = jnp.dot(sum_emb.astype(w1_ref.dtype), w1_ref[...],
                preferred_element_type=jnp.float32) + b1_ref[...]
    h = jnp.maximum(h, jnp.float32(0.0))

    # ---- fc2 + bias (padded class lanes get -1e30 from b2) ----
    logits = jnp.dot(h.astype(w2_ref.dtype), w2_ref[...],
                     preferred_element_type=jnp.float32) + b2_ref[...]

    # ---- softmax over the class lanes (exact normalization) ----
    m = jnp.max(logits, axis=1, keepdims=True)
    e = jnp.exp(logits - m)                              # padded lanes -> 0
    out_ref[...] = (e / jnp.sum(e, axis=1, keepdims=True)).astype(out_ref.dtype)


def dense_network_forward(x, emb_table, w1, b1, w2, b2):
    """x: [B, S] int token ids.  Returns softmax probabilities [B, C]."""
    B, S = x.shape
    VOCAB, E = emb_table.shape
    H = w1.shape[1]
    C = w2.shape[1]

    def rup(n, m):
        return pl.cdiv(n, m) * m

    # Lane-dense padding to multiples of 128 (not pow2 -> no FLOP/VMEM blowup).
    Vp = rup(VOCAB, 128)
    Ep = rup(E, 128)
    Hp = rup(H, 128)
    Cp = rup(C, 128)
    Sp = rup(S, SEQ_CHUNK)

    # Adaptive batch tile: big enough to feed the MXU, but keep >= 2 grid
    # steps when the batch allows so v7x's two TensorCores both get work.
    tb = min(TB_MAX, rup(B, 8))
    if tb > 8 and pl.cdiv(B, tb) < 2:
        tb = rup(pl.cdiv(B, 2), 8)
    B_pad = rup(B, tb)

    bf16 = jnp.bfloat16
    f32 = jnp.float32

    emb_pad = jnp.zeros((Vp, Ep), bf16).at[:VOCAB, :E].set(emb_table.astype(bf16))
    w1_pad = jnp.zeros((Ep, Hp), bf16).at[:E, :H].set(w1.astype(bf16))
    w2_pad = jnp.zeros((Hp, Cp), bf16).at[:H, :C].set(w2.astype(bf16))
    b1_pad = jnp.zeros((1, Hp), f32).at[0, :H].set(b1.reshape(-1).astype(f32))
    # Padded class lanes get -1e30 so softmax assigns them exactly zero mass.
    b2_pad = jnp.full((1, Cp), -1e30, f32).at[0, :C].set(b2.reshape(-1).astype(f32))
    # Padding token id -1 matches nothing in the one-hot -> contributes zero.
    x_pad = jnp.full((B_pad, Sp), -1, jnp.int32).at[:B, :S].set(x.astype(jnp.int32))

    kernel = functools.partial(dense_network_kernel, seq_chunk=SEQ_CHUNK)

    # Rough per-step VMEM footprint (weights resident + per-tile buffers).
    blk_bytes = (tb * Sp * 4 + Vp * Ep * 2 + Ep * Hp * 2 + Hp * Cp * 2
                 + Hp * 4 + Cp * 4 + tb * Cp * 4)
    vmem_limit = int(min(48 << 20, max(32 << 20, 4 * blk_bytes)))

    probs_pad = pl.pallas_call(
        kernel,
        out_shape=jax.ShapeDtypeStruct((B_pad, Cp), f32),
        grid=(B_pad // tb,),
        in_specs=[
            pl.BlockSpec((tb, Sp), lambda i: (i, 0)),    # token ids (per tile)
            pl.BlockSpec((Vp, Ep), lambda i: (0, 0)),    # embedding table
            pl.BlockSpec((Ep, Hp), lambda i: (0, 0)),    # W1
            pl.BlockSpec((1, Hp), lambda i: (0, 0)),     # b1
            pl.BlockSpec((Hp, Cp), lambda i: (0, 0)),    # W2
            pl.BlockSpec((1, Cp), lambda i: (0, 0)),     # b2
        ],
        out_specs=pl.BlockSpec((tb, Cp), lambda i: (i, 0)),
        compiler_params=pltpu.CompilerParams(
            dimension_semantics=("parallel",),           # batch tiles independent
            vmem_limit_bytes=vmem_limit,
        ),
    )(x_pad, emb_pad, w1_pad, b1_pad, w2_pad, b2_pad)

    return probs_pad[:B, :C]


if __name__ == "__main__":
    # Small, deterministic synthetic setup consistent with the module.
    B, S = 2, 8            # batch, sequence length
    VOCAB, E = 32, 16      # embedding table shape
    H = 70                 # self.hnum = 70
    C = 4                  # fc2 output classes

    key = jax.random.PRNGKey(0)
    k_emb, k_w1, k_b1, k_w2, k_b2, k_x = jax.random.split(key, 6)

    emb_table = jax.random.normal(k_emb, (VOCAB, E), dtype=jnp.float32)
    # nn.Linear(E, H): stored transposed for x @ W.
    w1 = jax.random.normal(k_w1, (E, H), dtype=jnp.float32) * 0.1
    b1 = jax.random.normal(k_b1, (H,), dtype=jnp.float32) * 0.1
    w2 = jax.random.normal(k_w2, (H, C), dtype=jnp.float32) * 0.1
    b2 = jax.random.normal(k_b2, (C,), dtype=jnp.float32) * 0.1

    x = jax.random.randint(k_x, (B, S), 0, VOCAB, dtype=jnp.int32)

    probs = jax.block_until_ready(
        dense_network_forward(x, emb_table, w1, b1, w2, b2))

    # Pure-JAX f32 reference check.
    embeds_ref = jnp.take(emb_table, x, axis=0)
    s_emb = jnp.sum(embeds_ref, axis=1)
    h_ref = jnp.maximum(s_emb @ w1 + b1, 0.0)
    ref = jax.nn.softmax(h_ref @ w2 + b2, axis=1)

    assert probs.shape == (B, C)
    # bf16 MXU operands (f32 accumulation) -> looser tolerance vs the f32 ref.
    assert jnp.allclose(probs, ref, atol=5e-2, rtol=5e-2), \
        float(jnp.max(jnp.abs(probs - ref)))
    # Exact-divide softmax: rows sum to 1 to f32 precision.
    assert jnp.allclose(jnp.sum(probs, axis=1), 1.0, atol=1e-5)

    print("KERNEL_OK")
</pallas_src>

<mosaic_0001>
module attributes {stable_mosaic.version = 11 : i64} {
  func.func @dense_network_kernel(%arg0: i32, %arg1: memref<8x8xi32, #tpu.memory_space<vmem>>, %arg2: memref<128x128xbf16, #tpu.memory_space<vmem>>, %arg3: memref<128x128xbf16, #tpu.memory_space<vmem>>, %arg4: memref<1x128xf32, #tpu.memory_space<vmem>>, %arg5: memref<128x128xbf16, #tpu.memory_space<vmem>>, %arg6: memref<1x128xf32, #tpu.memory_space<vmem>>, %arg7: memref<8x128xf32, #tpu.memory_space<vmem>>) attributes {dimension_semantics = [#tpu.dimension_semantics<parallel>], iteration_bounds = array<i64: 1>, scalar_prefetch = 0 : i64, scratch_operands = 0 : i64, tpu.core_type = #tpu.core_type<tc>, window_params = [{transform_indices = @transform_0, window_bounds = array<i64: 8, 8>}, {pipeline_mode = #tpu.pipeline_mode<synchronous>, transform_indices = @transform_1, window_bounds = array<i64: 128, 128>}, {pipeline_mode = #tpu.pipeline_mode<synchronous>, transform_indices = @transform_2, window_bounds = array<i64: 128, 128>}, {pipeline_mode = #tpu.pipeline_mode<synchronous>, transform_indices = @transform_3, window_bounds = array<i64: 1, 128>}, {pipeline_mode = #tpu.pipeline_mode<synchronous>, transform_indices = @transform_4, window_bounds = array<i64: 128, 128>}, {pipeline_mode = #tpu.pipeline_mode<synchronous>, transform_indices = @transform_5, window_bounds = array<i64: 1, 128>}, {transform_indices = @transform_6, window_bounds = array<i64: 8, 128>}]} {
    %c0 = arith.constant 0 : index
    %c0_0 = arith.constant 0 : index
    %0 = vector.load %arg1[%c0, %c0_0] : memref<8x8xi32, #tpu.memory_space<vmem>>, vector<8x8xi32>
    %1 = tpu.iota {dimensions = array<i32: 2>} : vector<8x8x128xi32>
    %cst = arith.constant 0.000000e+00 : f32
    %2 = vector.broadcast %cst : f32 to vector<8x128xf32>
    %3 = vector.shape_cast %0 : vector<8x8xi32> to vector<8x8x1xi32>
    %4 = vector.broadcast %3 : vector<8x8x1xi32> to vector<8x8x128xi32>
    %5 = arith.cmpi eq, %4, %1 : vector<8x8x128xi32>
    %6 = arith.extui %5 : vector<8x8x128xi1> to vector<8x8x128xi32>
    %7 = arith.sitofp %6 : vector<8x8x128xi32> to vector<8x8x128xf32>
    %cst_1 = arith.constant dense<0.000000e+00> : vector<8x128xf32>
    %8 = vector.multi_reduction <add>, %7, %cst_1 [1] : vector<8x8x128xf32> to vector<8x128xf32>
    %9 = arith.addf %2, %8 : vector<8x128xf32>
    %10 = arith.truncf %9 : vector<8x128xf32> to vector<8x128xbf16>
    %c0_2 = arith.constant 0 : index
    %c0_3 = arith.constant 0 : index
    %11 = vector.load %arg2[%c0_2, %c0_3] : memref<128x128xbf16, #tpu.memory_space<vmem>>, vector<128x128xbf16>
    %cst_4 = arith.constant dense<0.000000e+00> : vector<8x128xf32>
    %12 = tpu.matmul %10, %11, %cst_4 {dimension_numbers = #tpu.dot_dimension_numbers<[1], [0], [0], [1], [0, 0, 1, 1], [], []>} : vector<8x128xbf16>, vector<128x128xbf16>, vector<8x128xf32> -> vector<8x128xf32>
    %13 = arith.truncf %12 : vector<8x128xf32> to vector<8x128xbf16>
    %c0_5 = arith.constant 0 : index
    %c0_6 = arith.constant 0 : index
    %14 = vector.load %arg3[%c0_5, %c0_6] : memref<128x128xbf16, #tpu.memory_space<vmem>>, vector<128x128xbf16>
    %cst_7 = arith.constant dense<0.000000e+00> : vector<8x128xf32>
    %15 = tpu.matmul %13, %14, %cst_7 {dimension_numbers = #tpu.dot_dimension_numbers<[1], [0], [0], [1], [0, 0, 1, 1], [], []>} : vector<8x128xbf16>, vector<128x128xbf16>, vector<8x128xf32> -> vector<8x128xf32>
    %c0_8 = arith.constant 0 : index
    %c0_9 = arith.constant 0 : index
    %16 = vector.load %arg4[%c0_8, %c0_9] : memref<1x128xf32, #tpu.memory_space<vmem>>, vector<1x128xf32>
    %17 = vector.broadcast %16 : vector<1x128xf32> to vector<8x128xf32>
    %18 = arith.addf %15, %17 : vector<8x128xf32>
    %cst_10 = arith.constant 0.000000e+00 : f32
    %19 = vector.broadcast %cst_10 : f32 to vector<8x128xf32>
    %20 = arith.maximumf %18, %19 : vector<8x128xf32>
    %21 = arith.truncf %20 : vector<8x128xf32> to vector<8x128xbf16>
    %c0_11 = arith.constant 0 : index
    %c0_12 = arith.constant 0 : index
    %22 = vector.load %arg5[%c0_11, %c0_12] : memref<128x128xbf16, #tpu.memory_space<vmem>>, vector<128x128xbf16>
    %cst_13 = arith.constant dense<0.000000e+00> : vector<8x128xf32>
    %23 = tpu.matmul %21, %22, %cst_13 {dimension_numbers = #tpu.dot_dimension_numbers<[1], [0], [0], [1], [0, 0, 1, 1], [], []>} : vector<8x128xbf16>, vector<128x128xbf16>, vector<8x128xf32> -> vector<8x128xf32>
    %c0_14 = arith.constant 0 : index
    %c0_15 = arith.constant 0 : index
    %24 = vector.load %arg6[%c0_14, %c0_15] : memref<1x128xf32, #tpu.memory_space<vmem>>, vector<1x128xf32>
    %25 = vector.broadcast %24 : vector<1x128xf32> to vector<8x128xf32>
    %26 = arith.addf %23, %25 : vector<8x128xf32>
    %cst_16 = arith.constant dense<0xFF800000> : vector<8xf32>
    %27 = vector.multi_reduction <maximumf>, %26, %cst_16 [1] : vector<8x128xf32> to vector<8xf32>
    %28 = vector.shape_cast %27 : vector<8xf32> to vector<8x1xf32>
    %29 = vector.broadcast %28 : vector<8x1xf32> to vector<8x128xf32>
    %30 = arith.subf %26, %29 : vector<8x128xf32>
    %31 = math.exp %30 : vector<8x128xf32>
    %cst_17 = arith.constant dense<0.000000e+00> : vector<8xf32>
    %32 = vector.multi_reduction <add>, %31, %cst_17 [1] : vector<8x128xf32> to vector<8xf32>
    %33 = vector.shape_cast %32 : vector<8xf32> to vector<8x1xf32>
    %34 = vector.broadcast %33 : vector<8x1xf32> to vector<8x128xf32>
    %35 = arith.divf %31, %34 : vector<8x128xf32>
    %c0_18 = arith.constant 0 : index
    %c0_19 = arith.constant 0 : index
    %36 = vector.load %arg7[%c0_18, %c0_19] : memref<8x128xf32, #tpu.memory_space<vmem>>, vector<8x128xf32>
    tpu.vector_store %arg7[%c0_18, %c0_19], %35 {strides = array<i32>} : memref<8x128xf32, #tpu.memory_space<vmem>>, vector<8x128xf32>,
    return
  }
  func.func @transform_0(%arg0: i32) -> (i32, i32) {
    %c0_i32 = arith.constant 0 : i32
    %c0_i32_0 = arith.constant 0 : i32
    return %arg0, %c0_i32 : i32, i32
  }
  func.func @transform_1(%arg0: i32) -> (i32, i32) {
    %c0_i32 = arith.constant 0 : i32
    %c0_i32_0 = arith.constant 0 : i32
    %c0_i32_1 = arith.constant 0 : i32
    return %c0_i32, %c0_i32_0 : i32, i32
  }
  func.func @transform_2(%arg0: i32) -> (i32, i32) {
    %c0_i32 = arith.constant 0 : i32
    %c0_i32_0 = arith.constant 0 : i32
    %c0_i32_1 = arith.constant 0 : i32
    return %c0_i32, %c0_i32_0 : i32, i32
  }
  func.func @transform_3(%arg0: i32) -> (i32, i32) {
    %c0_i32 = arith.constant 0 : i32
    %c0_i32_0 = arith.constant 0 : i32
    %c0_i32_1 = arith.constant 0 : i32
    return %c0_i32, %c0_i32_0 : i32, i32
  }
  func.func @transform_4(%arg0: i32) -> (i32, i32) {
    %c0_i32 = arith.constant 0 : i32
    %c0_i32_0 = arith.constant 0 : i32
    %c0_i32_1 = arith.constant 0 : i32
    return %c0_i32, %c0_i32_0 : i32, i32
  }
  func.func @transform_5(%arg0: i32) -> (i32, i32) {
    %c0_i32 = arith.constant 0 : i32
    %c0_i32_0 = arith.constant 0 : i32
    %c0_i32_1 = arith.constant 0 : i32
    return %c0_i32, %c0_i32_0 : i32, i32
  }
  func.func @transform_6(%arg0: i32) -> (i32, i32) {
    %c0_i32 = arith.constant 0 : i32
    %c0_i32_0 = arith.constant 0 : i32
    return %arg0, %c0_i32 : i32, i32
  }
}

</mosaic_0001>

<llo_original>
// kernel: tpu_custom_call.1
$region0: #{tpu_custom_call.1}
  #allocation0 [shape = 'u32[]', space=smem, size = 0x4, offset = 0x4, fixed_abs, tag = 'smem constant byte address 0x4 - core index']
  #allocation1 [shape = 'u32[144,128]{1,0:T(1,128)}', space=vmem, size = 0x12000, scoped, tag = 'internal scratch']
  %s0 = inlined_call_operand.hbm [shape: s32[8,8], index: 0, kind: input, shape index: {}]
  %s1 = inlined_call_operand.hbm [shape: bf16[128,128], index: 1, kind: input, shape index: {}]
  %s2 = inlined_call_operand.hbm [shape: bf16[128,128], index: 2, kind: input, shape index: {}]
  %s3 = inlined_call_operand.vmem [shape: f32[1,128], index: 3, kind: input, shape index: {}]
  %s4 = inlined_call_operand.hbm [shape: bf16[128,128], index: 4, kind: input, shape index: {}]
  %s5 = inlined_call_operand.vmem [shape: f32[1,128], index: 5, kind: input, shape index: {}]
  %s6 = inlined_call_operand.hbm [shape: f32[8,128], index: 6, kind: output, shape index: {}]
  %s7 = sld [smem:[#allocation0]]
  $region50: #{tpu_custom_call.1} parent=0
    _
  %s9 = ssub.s32 1, %s7
  %s10 = scalar_select 0, %s9, %s7
  $region1: #{tpu_custom_call.1} parent=0
    #allocation2 [shape = 'u8[4096]{0}', space=vmem, size = 0x1000, scoped, tag = 'input window, operand 0, single buffered']
    #allocation3 [shape = 's32[1]{0}', space=sflag, size = 0x4, scoped, tag = 'scoped memory for tpu_custom_call.1']
    #allocation4 [shape = 's32[1]{0}', space=sflag, size = 0x4, scoped, tag = 'scoped memory for tpu_custom_call.1']
    #allocation5 [shape = 'u8[32768]{0}', space=vmem, size = 0x8000, scoped, tag = 'input window, operand 1, single buffered']
    #allocation6 [shape = 's32[1]{0}', space=sflag, size = 0x4, scoped, tag = 'scoped memory for tpu_custom_call.1']
    #allocation7 [shape = 'u8[32768]{0}', space=vmem, size = 0x8000, scoped, tag = 'input window, operand 2, single buffered']
    #allocation8 [shape = 'u8[32768]{0}', space=vmem, size = 0x8000, scoped, tag = 'input window, operand 4, single buffered']
    #allocation9 [shape = 's32[1]{0}', space=sflag, size = 0x4, scoped, tag = 'scoped memory for tpu_custom_call.1']
    #allocation10 [shape = 'u8[4096]{0}', space=vmem, size = 0x1000, scoped, tag = 'output window, operand 0, single buffered']
    %11 = vsyncpa [#allocation3], 0
    %12 = vsyncpa [#allocation6], 0
    %13 = vsyncpa [#allocation9], 0
    %14 = vsyncpa [#allocation4], 0
    // Predicated region
    $region2: #{tpu_custom_call.1} parent=1 // pred_check
      _
    $region3: #{tpu_custom_call.1} parent=1 // pred_check_branch
      %16 = sbr.rel (0) target = $region5
    $region4: #{tpu_custom_call.1} parent=1 // pred_region
      %s18 = ssub.s32 128, 128
      %19 = vsyncadd [#allocation3], %s18
      %s21 = sshll.u32 [#allocation2], 4
      %s22 = int_to_ptr.vmem [resolvable:$true] %s21
      %24 = dma.hbm_to_vmem [thread:$0]  %s0, 128, %s22, [#allocation3]
    $region5: #{tpu_custom_call.1} parent=1 // pred_fallthru
      _
    // Predicated region
    $region6: #{tpu_custom_call.1} parent=1 // pred_check
      _
    $region7: #{tpu_custom_call.1} parent=1 // pred_check_branch
      %26 = sbr.rel (0) target = $region9
    $region8: #{tpu_custom_call.1} parent=1 // pred_region
      %s28 = ssub.s32 1024, 1024
      %29 = vsyncadd [#allocation6], %s28
      %s30 = sshll.u32 [#allocation5], 4
      %s31 = int_to_ptr.vmem [resolvable:$true] %s30
      %36 = dma.hbm_to_vmem [thread:$0]  %s1, 1024, %s31, [#allocation6], 64, 64, 4
    $region9: #{tpu_custom_call.1} parent=1 // pred_fallthru
      _
    // Predicated region
    $region10: #{tpu_custom_call.1} parent=1 // pred_check
      _
    $region11: #{tpu_custom_call.1} parent=1 // pred_check_branch
      %38 = sbr.rel (0) target = $region13
    $region12: #{tpu_custom_call.1} parent=1 // pred_region
      %s40 = ssub.s32 1024, 1024
      %41 = vsyncadd [#allocation6], %s40
      %s42 = sshll.u32 [#allocation7], 4
      %s43 = int_to_ptr.vmem [resolvable:$true] %s42
      %48 = dma.hbm_to_vmem [thread:$0]  %s2, 1024, %s43, [#allocation6], 64, 64, 4
    $region13: #{tpu_custom_call.1} parent=1 // pred_fallthru
      _
    // Predicated region
    $region14: #{tpu_custom_call.1} parent=1 // pred_check
      _
    $region15: #{tpu_custom_call.1} parent=1 // pred_check_branch
      %50 = sbr.rel (0) target = $region17
    $region16: #{tpu_custom_call.1} parent=1 // pred_region
      _
    $region17: #{tpu_custom_call.1} parent=1 // pred_fallthru
      _
    // Predicated region
    $region18: #{tpu_custom_call.1} parent=1 // pred_check
      _
    $region19: #{tpu_custom_call.1} parent=1 // pred_check_branch
      %52 = sbr.rel (0) target = $region21
    $region20: #{tpu_custom_call.1} parent=1 // pred_region
      %s54 = ssub.s32 1024, 1024
      %55 = vsyncadd [#allocation9], %s54
      %s56 = sshll.u32 [#allocation8], 4
      %s57 = int_to_ptr.vmem [resolvable:$true] %s56
      %62 = dma.hbm_to_vmem [thread:$0]  %s4, 1024, %s57, [#allocation9], 64, 64, 4
    $region21: #{tpu_custom_call.1} parent=1 // pred_fallthru
      _
    // Predicated region
    $region22: #{tpu_custom_call.1} parent=1 // pred_check
      _
    $region23: #{tpu_custom_call.1} parent=1 // pred_check_branch
      %64 = sbr.rel (0) target = $region25
    $region24: #{tpu_custom_call.1} parent=1 // pred_region
      _
    $region25: #{tpu_custom_call.1} parent=1 // pred_fallthru
      _
    // Predicated region
    $region26: #{tpu_custom_call.1} parent=1 // pred_check
      _
    $region27: #{tpu_custom_call.1} parent=1 // pred_check_branch
      %66 = sbr.rel (0) target = $region29
    $region28: #{tpu_custom_call.1} parent=1 // pred_region
      %67 = dma.done [#allocation3], 128
    $region29: #{tpu_custom_call.1} parent=1 // pred_fallthru
      _
    // Predicated region
    $region30: #{tpu_custom_call.1} parent=1 // pred_check
      _
    $region31: #{tpu_custom_call.1} parent=1 // pred_check_branch
      %69 = sbr.rel (0) target = $region33
    $region32: #{tpu_custom_call.1} parent=1 // pred_region
      %70 = dma.done [#allocation6], 1024
    $region33: #{tpu_custom_call.1} parent=1 // pred_fallthru
      _
    // Predicated region
    $region34: #{tpu_custom_call.1} parent=1 // pred_check
      _
    $region35: #{tpu_custom_call.1} parent=1 // pred_check_branch
      %72 = sbr.rel (0) target = $region37
    $region36: #{tpu_custom_call.1} parent=1 // pred_region
      %73 = dma.done [#allocation6], 1024
    $region37: #{tpu_custom_call.1} parent=1 // pred_fallthru
      _
    // Predicated region
    $region38: #{tpu_custom_call.1} parent=1 // pred_check
      _
    $region39: #{tpu_custom_call.1} parent=1 // pred_check_branch
      %75 = sbr.rel (0) target = $region41
    $region40: #{tpu_custom_call.1} parent=1 // pred_region
      %76 = dma.done [#allocation9], 1024
    $region41: #{tpu_custom_call.1} parent=1 // pred_fallthru
      _
    %v78 = vld [vmem:[#allocation2] sm:$0xff]
    %v79 = vlaneseq
    %v80 = vand.u32 %v79, 127
    %v81 = vlaneseq
    %v82 = vshrl.u32 %v81, 7
    %v83 = vsub.s32 0, %v82
    %v84 = vrot.slane %v78, %v83
    %86 = vbcast.lane.b32.xlu0 %v84, 256
    %v87 = vpop.permute.xlu0 %86
    %v88 = vlaneseq
    %v89 = vshrl.u32 %v88, 7
    %v90 = vsub.s32 1, %v89
    %v91 = vrot.slane %v78, %v90
    %93 = vbcast.lane.b32.xlu0 %v91, 256
    %v94 = vpop.permute.xlu0 %93
    %v95 = vlaneseq
    %v96 = vshrl.u32 %v95, 7
    %v97 = vsub.s32 2, %v96
    %v98 = vrot.slane %v78, %v97
    %100 = vbcast.lane.b32.xlu0 %v98, 256
    %v101 = vpop.permute.xlu0 %100
    %v102 = vlaneseq
    %v103 = vshrl.u32 %v102, 7
    %v104 = vsub.s32 3, %v103
    %v105 = vrot.slane %v78, %v104
    %107 = vbcast.lane.b32.xlu0 %v105, 256
    %v108 = vpop.permute.xlu0 %107
    %v109 = vlaneseq
    %v110 = vshrl.u32 %v109, 7
    %v111 = vsub.s32 4, %v110
    %v112 = vrot.slane %v78, %v111
    %114 = vbcast.lane.b32.xlu0 %v112, 256
    %v115 = vpop.permute.xlu0 %114
    %v116 = vlaneseq
    %v117 = vshrl.u32 %v116, 7
    %v118 = vsub.s32 5, %v117
    %v119 = vrot.slane %v78, %v118
    %121 = vbcast.lane.b32.xlu0 %v119, 256
    %v122 = vpop.permute.xlu0 %121
    %v123 = vlaneseq
    %v124 = vshrl.u32 %v123, 7
    %v125 = vsub.s32 6, %v124
    %v126 = vrot.slane %v78, %v125
    %128 = vbcast.lane.b32.xlu0 %v126, 256
    %v129 = vpop.permute.xlu0 %128
    %v130 = vlaneseq
    %v131 = vshrl.u32 %v130, 7
    %v132 = vsub.s32 7, %v131
    %v133 = vrot.slane %v78, %v132
    %135 = vbcast.lane.b32.xlu0 %v133, 256
    %v136 = vpop.permute.xlu0 %135
    %vm137 = vcmp.eq.s32.totalorder %v87, %v80
    %vm138 = vcmp.eq.s32.totalorder %v94, %v80
    %vm139 = vcmp.eq.s32.totalorder %v101, %v80
    %vm140 = vcmp.eq.s32.totalorder %v108, %v80
    %vm141 = vcmp.eq.s32.totalorder %v115, %v80
    %vm142 = vcmp.eq.s32.totalorder %v122, %v80
    %vm143 = vcmp.eq.s32.totalorder %v129, %v80
    %vm144 = vcmp.eq.s32.totalorder %v136, %v80
    %v145 = vsel %vm137, 1, 0
    %v146 = vsel %vm138, 1, 0
    %v147 = vsel %vm139, 1, 0
    %v148 = vsel %vm140, 1, 0
    %v149 = vsel %vm141, 1, 0
    %v150 = vsel %vm142, 1, 0
    %v151 = vsel %vm143, 1, 0
    %v152 = vsel %vm144, 1, 0
    %v153 = vcvt.s32.f32 %v145
    %v154 = vcvt.s32.f32 %v146
    %v155 = vcvt.s32.f32 %v147
    %v156 = vcvt.s32.f32 %v148
    %v157 = vcvt.s32.f32 %v149
    %v158 = vcvt.s32.f32 %v150
    %v159 = vcvt.s32.f32 %v151
    %v160 = vcvt.s32.f32 %v152
    %v161 = vrot.slane %v153, 4
    %v162 = vadd.f32 %v153, %v161
    %v163 = vrot.slane %v162, 2
    %v164 = vadd.f32 %v162, %v163
    %v165 = vrot.slane %v164, 1
    %v166 = vadd.f32 %v164, %v165
    %v167 = vrot.slane %v154, 4
    %v168 = vadd.f32 %v154, %v167
    %v169 = vrot.slane %v168, 2
    %v170 = vadd.f32 %v168, %v169
    %v171 = vrot.slane %v170, 1
    %v172 = vadd.f32 %v170, %v171
    %v173 = vrot.slane %v155, 4
    %v174 = vadd.f32 %v155, %v173
    %v175 = vrot.slane %v174, 2
    %v176 = vadd.f32 %v174, %v175
    %v177 = vrot.slane %v176, 1
    %v178 = vadd.f32 %v176, %v177
    %v179 = vrot.slane %v156, 4
    %v180 = vadd.f32 %v156, %v179
    %v181 = vrot.slane %v180, 2
    %v182 = vadd.f32 %v180, %v181
    %v183 = vrot.slane %v182, 1
    %v184 = vadd.f32 %v182, %v183
    %v185 = vrot.slane %v157, 4
    %v186 = vadd.f32 %v157, %v185
    %v187 = vrot.slane %v186, 2
    %v188 = vadd.f32 %v186, %v187
    %v189 = vrot.slane %v188, 1
    %v190 = vadd.f32 %v188, %v189
    %v191 = vrot.slane %v158, 4
    %v192 = vadd.f32 %v158, %v191
    %v193 = vrot.slane %v192, 2
    %v194 = vadd.f32 %v192, %v193
    %v195 = vrot.slane %v194, 1
    %v196 = vadd.f32 %v194, %v195
    %v197 = vrot.slane %v159, 4
    %v198 = vadd.f32 %v159, %v197
    %v199 = vrot.slane %v198, 2
    %v200 = vadd.f32 %v198, %v199
    %v201 = vrot.slane %v200, 1
    %v202 = vadd.f32 %v200, %v201
    %v203 = vrot.slane %v160, 4
    %v204 = vadd.f32 %v160, %v203
    %v205 = vrot.slane %v204, 2
    %v206 = vadd.f32 %v204, %v205
    %v207 = vrot.slane %v206, 1
    %v208 = vadd.f32 %v206, %v207
    %v209 = vadd.f32 %v166, 0.0
    %v210 = vadd.f32 %v172, 0.0
    %v211 = vadd.f32 %v178, 0.0
    %v212 = vadd.f32 %v184, 0.0
    %v213 = vadd.f32 %v190, 0.0
    %v214 = vadd.f32 %v196, 0.0
    %v215 = vadd.f32 %v202, 0.0
    %v216 = vadd.f32 %v208, 0.0
    %v217 = vpack.c.bf16 %v209, %v209
    %v218 = vpack.c.bf16 %v210, %v210
    %v219 = vpack.c.bf16 %v211, %v211
    %v220 = vpack.c.bf16 %v212, %v212
    %v221 = vpack.c.bf16 %v213, %v213
    %v222 = vpack.c.bf16 %v214, %v214
    %v223 = vpack.c.bf16 %v215, %v215
    %v224 = vpack.c.bf16 %v216, %v216
    %v225 = vld [vmem:[#allocation5] sm:$0xf]
    %v226 = vld [vmem:[#allocation5 + $0x4] sm:$0xf]
    %v227 = vld [vmem:[#allocation5 + $0x8] sm:$0xf]
    %v228 = vld [vmem:[#allocation5 + $0xc] sm:$0xf]
    %v229 = vld [vmem:[#allocation5 + $0x10] sm:$0xf]
    %v230 = vld [vmem:[#allocation5 + $0x14] sm:$0xf]
    %v231 = vld [vmem:[#allocation5 + $0x18] sm:$0xf]
    %v232 = vld [vmem:[#allocation5 + $0x1c] sm:$0xf]
    %v233 = vld [vmem:[#allocation5 + $0x20] sm:$0xf]
    %v234 = vld [vmem:[#allocation5 + $0x24] sm:$0xf]
    %v235 = vld [vmem:[#allocation5 + $0x28] sm:$0xf]
    %v236 = vld [vmem:[#allocation5 + $0x2c] sm:$0xf]
    %v237 = vld [vmem:[#allocation5 + $0x30] sm:$0xf]
    %v238 = vld [vmem:[#allocation5 + $0x34] sm:$0xf]
    %v239 = vld [vmem:[#allocation5 + $0x38] sm:$0xf]
    %v240 = vld [vmem:[#allocation5 + $0x3c] sm:$0xf]
    %v249 = vunpack.c.l.b16 %v217
    %v250 = vunpack.c.l.b16 %v218
    %v251 = vunpack.c.l.b16 %v219
    %v252 = vunpack.c.l.b16 %v220
    %v253 = vunpack.c.l.b16 %v221
    %v254 = vunpack.c.l.b16 %v222
    %v255 = vunpack.c.l.b16 %v223
    %v256 = vunpack.c.l.b16 %v224
    %vm257 = vcmask 1041409
    %v258 = vsel %vm257, %v250, %v249
    %vm259 = vcmask 1042434
    %v260 = vsel %vm259, %v251, %v258
    %vm261 = vcmask 1043459
    %v262 = vsel %vm261, %v252, %v260
    %vm263 = vcmask 1044484
    %v264 = vsel %vm263, %v253, %v262
    %vm265 = vcmask 1045509
    %v266 = vsel %vm265, %v254, %v264
    %vm267 = vcmask 1046534
    %v268 = vsel %vm267, %v255, %v266
    %vm269 = vcmask 1047559
    %v270 = vsel %vm269, %v256, %v268
    %v271 = vpack.c.b16 %v270, %v270
    %v289 = vunpack.c.l.b16 %v225
    %v290 = vunpack.c.l.b16 %v226
    %v291 = vunpack.c.l.b16 %v227
    %v292 = vunpack.c.l.b16 %v228
    %v293 = vunpack.c.l.b16 %v229
    %v294 = vunpack.c.l.b16 %v230
    %v295 = vunpack.c.l.b16 %v231
    %v296 = vunpack.c.l.b16 %v232
    %v297 = vunpack.c.l.b16 %v233
    %v298 = vunpack.c.l.b16 %v234
    %v299 = vunpack.c.l.b16 %v235
    %v300 = vunpack.c.l.b16 %v236
    %v301 = vunpack.c.l.b16 %v237
    %v302 = vunpack.c.l.b16 %v238
    %v303 = vunpack.c.l.b16 %v239
    %v304 = vunpack.c.l.b16 %v240
    %v305 = vpack.c.b16 %v290, %v289
    %v306 = vpack.c.b16 %v292, %v291
    %v307 = vpack.c.b16 %v294, %v293
    %v308 = vpack.c.b16 %v296, %v295
    %v309 = vpack.c.b16 %v298, %v297
    %v310 = vpack.c.b16 %v300, %v299
    %v311 = vpack.c.b16 %v302, %v301
    %v312 = vpack.c.b16 %v304, %v303
    %321 = vmatprep.subr.bf16.mxu0 0
    %322 = vmatpush1.bf16.msra.mxu0 %v305
    %323 = vmatprep.subr.bf16.mxu0 0
    %324 = vmatpush1.bf16.msra.mxu0 %v306
    %325 = vmatprep.subr.bf16.mxu0 0
    %326 = vmatpush1.bf16.msra.mxu0 %v307
    %327 = vmatprep.subr.bf16.mxu0 0
    %328 = vmatpush1.bf16.msra.mxu0 %v308
    %329 = vmatprep.subr.bf16.mxu0 0
    %330 = vmatpush1.bf16.msra.mxu0 %v309
    %331 = vmatprep.subr.bf16.mxu0 0
    %332 = vmatpush1.bf16.msra.mxu0 %v310
    %333 = vmatprep.subr.bf16.mxu0 0
    %334 = vmatpush1.bf16.msra.mxu0 %v311
    %335 = vmatprep.subr.bf16.mxu0 0
    %336 = vmatpush1.bf16.msra.mxu0 %v312
    %337 = vmatprep.subr.bf16.mxu0 0
    %338 = vmatpush1.bf16.msra.mxu0 0
    %339 = vmatprep.subr.bf16.mxu0 0
    %340 = vmatpush1.bf16.msra.mxu0 0
    %341 = vmatprep.subr.bf16.mxu0 0
    %342 = vmatpush1.bf16.msra.mxu0 0
    %343 = vmatprep.subr.bf16.mxu0 0
    %344 = vmatpush1.bf16.msra.mxu0 0
    %345 = vmatprep.subr.bf16.mxu0 0
    %346 = vmatpush1.bf16.msra.mxu0 0
    %347 = vmatprep.subr.bf16.mxu0 0
    %348 = vmatpush1.bf16.msra.mxu0 0
    %349 = vmatprep.subr.bf16.mxu0 0
    %350 = vmatpush1.bf16.msra.mxu0 0
    %351 = vmatprep.subr.bf16.mxu0 0
    %352 = vmatpush1.bf16.msra.mxu0 0
    %353 = vmatprep.mubr.bf16.mxu0 0
    %354 = vmatmul.mubr.bf16.gmra.mrb[0].mxu0 %v271
    %v355 = vpop.f32.mrb[0].mxu0
    %v356 = vadd.f32 0.0, %v355
    %v357 = vpop.f32.mrb[0].mxu0
    %v358 = vpop.f32.mrb[0].mxu0
    %v359 = vpop.f32.mrb[0].mxu0
    %360 = vdwg.mxu0
    %v361 = vpack.c.bf16 %v356, %v356
    %v362 = vld [vmem:[#allocation7] sm:$0xf]
    %v363 = vld [vmem:[#allocation7 + $0x4] sm:$0xf]
    %v364 = vld [vmem:[#allocation7 + $0x8] sm:$0xf]
    %v365 = vld [vmem:[#allocation7 + $0xc] sm:$0xf]
    %v366 = vld [vmem:[#allocation7 + $0x10] sm:$0xf]
    %v367 = vld [vmem:[#allocation7 + $0x14] sm:$0xf]
    %v368 = vld [vmem:[#allocation7 + $0x18] sm:$0xf]
    %v369 = vld [vmem:[#allocation7 + $0x1c] sm:$0xf]
    %v370 = vld [vmem:[#allocation7 + $0x20] sm:$0xf]
    %v371 = vld [vmem:[#allocation7 + $0x24] sm:$0xf]
    %v372 = vld [vmem:[#allocation7 + $0x28] sm:$0xf]
    %v373 = vld [vmem:[#allocation7 + $0x2c] sm:$0xf]
    %v374 = vld [vmem:[#allocation7 + $0x30] sm:$0xf]
    %v375 = vld [vmem:[#allocation7 + $0x34] sm:$0xf]
    %v376 = vld [vmem:[#allocation7 + $0x38] sm:$0xf]
    %v377 = vld [vmem:[#allocation7 + $0x3c] sm:$0xf]
    %v378 = vld [vmem:[%s3] sm:$0x1]
    %v380 = vlaneseq
    %v381 = vshrl.u32 %v380, 7
    %v382 = vsub.s32 0, %v381
    %v383 = vrot.slane %v378, %v382
    %v401 = vunpack.c.l.b16 %v362
    %v402 = vunpack.c.l.b16 %v363
    %v403 = vunpack.c.l.b16 %v364
    %v404 = vunpack.c.l.b16 %v365
    %v405 = vunpack.c.l.b16 %v366
    %v406 = vunpack.c.l.b16 %v367
    %v407 = vunpack.c.l.b16 %v368
    %v408 = vunpack.c.l.b16 %v369
    %v409 = vunpack.c.l.b16 %v370
    %v410 = vunpack.c.l.b16 %v371
    %v411 = vunpack.c.l.b16 %v372
    %v412 = vunpack.c.l.b16 %v373
    %v413 = vunpack.c.l.b16 %v374
    %v414 = vunpack.c.l.b16 %v375
    %v415 = vunpack.c.l.b16 %v376
    %v416 = vunpack.c.l.b16 %v377
    %v417 = vpack.c.b16 %v402, %v401
    %v418 = vpack.c.b16 %v404, %v403
    %v419 = vpack.c.b16 %v406, %v405
    %v420 = vpack.c.b16 %v408, %v407
    %v421 = vpack.c.b16 %v410, %v409
    %v422 = vpack.c.b16 %v412, %v411
    %v423 = vpack.c.b16 %v414, %v413
    %v424 = vpack.c.b16 %v416, %v415
    %433 = vmatprep.subr.bf16.mxu0 0
    %434 = vmatpush1.bf16.msra.mxu0 %v417
    %435 = vmatprep.subr.bf16.mxu0 0
    %436 = vmatpush1.bf16.msra.mxu0 %v418
    %437 = vmatprep.subr.bf16.mxu0 0
    %438 = vmatpush1.bf16.msra.mxu0 %v419
    %439 = vmatprep.subr.bf16.mxu0 0
    %440 = vmatpush1.bf16.msra.mxu0 %v420
    %441 = vmatprep.subr.bf16.mxu0 0
    %442 = vmatpush1.bf16.msra.mxu0 %v421
    %443 = vmatprep.subr.bf16.mxu0 0
    %444 = vmatpush1.bf16.msra.mxu0 %v422
    %445 = vmatprep.subr.bf16.mxu0 0
    %446 = vmatpush1.bf16.msra.mxu0 %v423
    %447 = vmatprep.subr.bf16.mxu0 0
    %448 = vmatpush1.bf16.msra.mxu0 %v424
    %449 = vmatprep.subr.bf16.mxu0 0
    %450 = vmatpush1.bf16.msra.mxu0 0
    %451 = vmatprep.subr.bf16.mxu0 0
    %452 = vmatpush1.bf16.msra.mxu0 0
    %453 = vmatprep.subr.bf16.mxu0 0
    %454 = vmatpush1.bf16.msra.mxu0 0
    %455 = vmatprep.subr.bf16.mxu0 0
    %456 = vmatpush1.bf16.msra.mxu0 0
    %457 = vmatprep.subr.bf16.mxu0 0
    %458 = vmatpush1.bf16.msra.mxu0 0
    %459 = vmatprep.subr.bf16.mxu0 0
    %460 = vmatpush1.bf16.msra.mxu0 0
    %461 = vmatprep.subr.bf16.mxu0 0
    %462 = vmatpush1.bf16.msra.mxu0 0
    %463 = vmatprep.subr.bf16.mxu0 0
    %464 = vmatpush1.bf16.msra.mxu0 0
    %465 = vmatprep.mubr.bf16.mxu0 0
    %466 = vmatmul.mubr.bf16.gmra.mrb[0].mxu0 %v361
    %v467 = vpop.f32.mrb[0].mxu0
    %v468 = vadd.f32 %v383, %v467
    %v469 = vpop.f32.mrb[0].mxu0
    %v470 = vpop.f32.mrb[0].mxu0
    %v471 = vpop.f32.mrb[0].mxu0
    %472 = vdwg.mxu0
    %v473 = vmax.f32 %v468, 0.0
    %v474 = vpack.c.bf16 %v473, %v473
    %v475 = vld [vmem:[#allocation8] sm:$0xf]
    %v476 = vld [vmem:[#allocation8 + $0x4] sm:$0xf]
    %v477 = vld [vmem:[#allocation8 + $0x8] sm:$0xf]
    %v478 = vld [vmem:[#allocation8 + $0xc] sm:$0xf]
    %v479 = vld [vmem:[#allocation8 + $0x10] sm:$0xf]
    %v480 = vld [vmem:[#allocation8 + $0x14] sm:$0xf]
    %v481 = vld [vmem:[#allocation8 + $0x18] sm:$0xf]
    %v482 = vld [vmem:[#allocation8 + $0x1c] sm:$0xf]
    %v483 = vld [vmem:[#allocation8 + $0x20] sm:$0xf]
    %v484 = vld [vmem:[#allocation8 + $0x24] sm:$0xf]
    %v485 = vld [vmem:[#allocation8 + $0x28] sm:$0xf]
    %v486 = vld [vmem:[#allocation8 + $0x2c] sm:$0xf]
    %v487 = vld [vmem:[#allocation8 + $0x30] sm:$0xf]
    %v488 = vld [vmem:[#allocation8 + $0x34] sm:$0xf]
    %v489 = vld [vmem:[#allocation8 + $0x38] sm:$0xf]
    %v490 = vld [vmem:[#allocation8 + $0x3c] sm:$0xf]
    %v491 = vld [vmem:[%s5] sm:$0x1]
    %v493 = vlaneseq
    %v494 = vshrl.u32 %v493, 7
    %v495 = vsub.s32 0, %v494
    %v496 = vrot.slane %v491, %v495
    %v514 = vunpack.c.l.b16 %v475
    %v515 = vunpack.c.l.b16 %v476
    %v516 = vunpack.c.l.b16 %v477
    %v517 = vunpack.c.l.b16 %v478
    %v518 = vunpack.c.l.b16 %v479
    %v519 = vunpack.c.l.b16 %v480
    %v520 = vunpack.c.l.b16 %v481
    %v521 = vunpack.c.l.b16 %v482
    %v522 = vunpack.c.l.b16 %v483
    %v523 = vunpack.c.l.b16 %v484
    %v524 = vunpack.c.l.b16 %v485
    %v525 = vunpack.c.l.b16 %v486
    %v526 = vunpack.c.l.b16 %v487
    %v527 = vunpack.c.l.b16 %v488
    %v528 = vunpack.c.l.b16 %v489
    %v529 = vunpack.c.l.b16 %v490
    %v530 = vpack.c.b16 %v515, %v514
    %v531 = vpack.c.b16 %v517, %v516
    %v532 = vpack.c.b16 %v519, %v518
    %v533 = vpack.c.b16 %v521, %v520
    %v534 = vpack.c.b16 %v523, %v522
    %v535 = vpack.c.b16 %v525, %v524
    %v536 = vpack.c.b16 %v527, %v526
    %v537 = vpack.c.b16 %v529, %v528
    %546 = vmatprep.subr.bf16.mxu0 0
    %547 = vmatpush1.bf16.msra.mxu0 %v530
    %548 = vmatprep.subr.bf16.mxu0 0
    %549 = vmatpush1.bf16.msra.mxu0 %v531
    %550 = vmatprep.subr.bf16.mxu0 0
    %551 = vmatpush1.bf16.msra.mxu0 %v532
    %552 = vmatprep.subr.bf16.mxu0 0
    %553 = vmatpush1.bf16.msra.mxu0 %v533
    %554 = vmatprep.subr.bf16.mxu0 0
    %555 = vmatpush1.bf16.msra.mxu0 %v534
    %556 = vmatprep.subr.bf16.mxu0 0
    %557 = vmatpush1.bf16.msra.mxu0 %v535
    %558 = vmatprep.subr.bf16.mxu0 0
    %559 = vmatpush1.bf16.msra.mxu0 %v536
    %560 = vmatprep.subr.bf16.mxu0 0
    %561 = vmatpush1.bf16.msra.mxu0 %v537
    %562 = vmatprep.subr.bf16.mxu0 0
    %563 = vmatpush1.bf16.msra.mxu0 0
    %564 = vmatprep.subr.bf16.mxu0 0
    %565 = vmatpush1.bf16.msra.mxu0 0
    %566 = vmatprep.subr.bf16.mxu0 0
    %567 = vmatpush1.bf16.msra.mxu0 0
    %568 = vmatprep.subr.bf16.mxu0 0
    %569 = vmatpush1.bf16.msra.mxu0 0
    %570 = vmatprep.subr.bf16.mxu0 0
    %571 = vmatpush1.bf16.msra.mxu0 0
    %572 = vmatprep.subr.bf16.mxu0 0
    %573 = vmatpush1.bf16.msra.mxu0 0
    %574 = vmatprep.subr.bf16.mxu0 0
    %575 = vmatpush1.bf16.msra.mxu0 0
    %576 = vmatprep.subr.bf16.mxu0 0
    %577 = vmatpush1.bf16.msra.mxu0 0
    %578 = vmatprep.mubr.bf16.mxu0 0
    %579 = vmatmul.mubr.bf16.gmra.mrb[0].mxu0 %v474
    %v580 = vpop.f32.mrb[0].mxu0
    %v581 = vadd.f32 %v496, %v580
    %v582 = vpop.f32.mrb[0].mxu0
    %v583 = vpop.f32.mrb[0].mxu0
    %v584 = vpop.f32.mrb[0].mxu0
    %585 = vdwg.mxu0
    %586 = vmax.xlane.f32.xlu0 %v581
    %v587 = vpop.xlane.xlu0 %586
    %v588 = vsub.f32 %v581, %v587
    %v589 = vmul.f32 %v588, 1.442695
    %v590 = vpow.pop %v589
    %591 = vadd.xlane.f32.xlu0 %v590
    %v592 = vpop.xlane.xlu0 %591
    %v593 = vrcp.pop %v592
    %v594 = vmul.f32 %v590, %v593
    %595 = vst [vmem:[#allocation10] sm:$0xff] %v594
    // Predicated region
    $region42: #{tpu_custom_call.1} parent=1 // pred_check
      _
    $region43: #{tpu_custom_call.1} parent=1 // pred_check_branch
      %597 = sbr.rel (0) target = $region45
    $region44: #{tpu_custom_call.1} parent=1 // pred_region
      %s599 = ssub.s32 128, 128
      %600 = vsyncadd [#allocation4], %s599
      %s602 = sshll.u32 [#allocation10], 4
      %s603 = int_to_ptr.vmem [resolvable:$true] %s602
      %605 = dma.vmem_to_hbm [thread:$0]  %s603, 128, %s6, [#allocation4]
    $region45: #{tpu_custom_call.1} parent=1 // pred_fallthru
      _
    // Predicated region
    $region46: #{tpu_custom_call.1} parent=1 // pred_check
      _
    $region47: #{tpu_custom_call.1} parent=1 // pred_check_branch
      %607 = sbr.rel (0) target = $region49
    $region48: #{tpu_custom_call.1} parent=1 // pred_region
      %608 = dma.done [#allocation4], 128
    $region49: #{tpu_custom_call.1} parent=1 // pred_fallthru
      _
    %609 = vsyncpa [#allocation3], 1
    %610 = vsyncpa [#allocation6], 1
    %611 = vsyncpa [#allocation9], 1
    %612 = vsyncpa [#allocation4], 1

</llo_original>
